<compile_context>
chip_gen: v5e
topology: v5e:2x2
jax: 0.10.0
libtpu: 0.0.40
codegen_flags: <defaults>
</compile_context>

<pallas_src>
import functools
import warnings

import jax
import jax.numpy as jnp
from jax.experimental import pallas as pl
from jax.experimental.pallas import tpu as pltpu

_MiB = 1 << 20
_SINGLE_BLOCK_BYTES = 2 * _MiB   # whole array as one block at/below this size
_TARGET_BLOCK_BYTES = 2 * _MiB   # per-block target when gridding


def _copy_kernel(x_ref, o_ref):
    # Trivial elementwise pass-through of the VMEM tile.
    o_ref[...] = x_ref[...]


def _sublane_multiple(dtype) -> int:
    """Row-tile granularity: 8 sublanes x (32 / bitwidth) packing factor."""
    itemsize = jnp.dtype(dtype).itemsize
    if itemsize >= 4:
        return 8
    if itemsize == 2:
        return 16
    return 32


def _identity_copy_2d(x2d: jax.Array) -> jax.Array:
    """Identity copy of a 2-D array via a row-tiled, lane-dense Pallas kernel."""
    rows, cols = x2d.shape
    itemsize = jnp.dtype(x2d.dtype).itemsize
    total_bytes = rows * cols * itemsize
    sub = _sublane_multiple(x2d.dtype)

    if total_bytes <= _SINGLE_BLOCK_BYTES or rows <= sub:
        # Small / short array: one full-extent block, no grid overhead.
        grid = (1,)
        block_rows = rows
    else:
        # ~2 MiB blocks, row count rounded down to the sublane multiple.
        block_rows = max(sub, (_TARGET_BLOCK_BYTES // (cols * itemsize)) // sub * sub)
        # total_bytes > target guarantees block_rows < rows, i.e. grid >= 2,
        # so both v7x TensorCores get work under dimension_semantics=parallel.
        grid = (pl.cdiv(rows, block_rows),)

    bytes_accessed = 2 * rows * cols * itemsize  # read + write

    return pl.pallas_call(
        _copy_kernel,
        out_shape=jax.ShapeDtypeStruct((rows, cols), x2d.dtype),
        grid_spec=pl.GridSpec(
            grid=grid,
            in_specs=[pl.BlockSpec((block_rows, cols), lambda i: (i, 0))],
            out_specs=pl.BlockSpec((block_rows, cols), lambda i: (i, 0)),
        ),
        compiler_params=pltpu.CompilerParams(
            dimension_semantics=("parallel",),
        ),
        cost_estimate=pl.CostEstimate(
            flops=0,
            transcendentals=0,
            bytes_accessed=bytes_accessed,
        ),
        input_output_aliases={0: 0},
    )(x2d)


def _lane_dense_2d(x: jax.Array) -> jax.Array:
    """Reshape to a lane-dense 2-D slab (last dim a large multiple of 128)."""
    total = x.size
    # Prefer the widest lane dim that divides the element count: bigger
    # contiguous DMA rows, every vreg lane used, unmasked stores.
    for lanes in (1024, 512, 256, 128):
        if total % lanes == 0:
            return x.reshape(total // lanes, lanes)

    # Fallback for non-128-divisible sizes: collapse trailing dims until the
    # lane axis is at least 128 wide (full-extent block keeps it legal).
    # TODO(synk): this path still ends in masked stores for ragged lane widths.
    shape = x.shape
    if len(shape) == 0:
        return x.reshape(1, 1)
    trailing = 1
    k = len(shape)
    while k > 1 and trailing < 128:
        k -= 1
        trailing *= shape[k]
    lead = total // trailing
    return x.reshape(lead, trailing)


@functools.partial(jax.jit, donate_argnums=(0,))
def unimplemented_model_forward(x: jax.Array) -> jax.Array:
    """Placeholder forward for UnimplementedModel: identity on the input.

    x: [N, C, H, W] (NCHW, matching the PyTorch conv-input convention).
    Returns an array with identical shape/dtype/values. The input buffer is
    donated so the in-kernel input/output alias is honored by XLA.
    """
    orig_shape = x.shape
    if x.size == 0:
        return x
    x2d = _lane_dense_2d(x)
    out2d = _identity_copy_2d(x2d)
    return out2d.reshape(orig_shape)


if __name__ == "__main__":
    # Donation warnings (if XLA cannot honor the alias on some backend) are
    # informational only; keep the run output clean.
    warnings.filterwarnings("ignore", message="Some donated buffers were not usable")

    key = jax.random.PRNGKey(0)
    # Small NCHW input consistent with a typical layer-model forward.
    x = jax.random.normal(key, (2, 4, 16, 16), dtype=jnp.float32)

    # The forward donates its argument; pass a copy so `x` stays alive for the
    # correctness check below.
    x_input = jnp.copy(x)
    y = unimplemented_model_forward(x_input)
    jax.block_until_ready(y)

    # Sanity check: identity semantics (the only well-defined behavior here).
    assert y.shape == x.shape and y.dtype == x.dtype
    assert bool(jnp.allclose(y, x))

    print("KERNEL_OK")
</pallas_src>

<mosaic_0001>
module attributes {stable_mosaic.version = 11 : i64} {
  func.func @_copy_kernel(%arg0: i32, %arg1: memref<2x1024xf32, #tpu.memory_space<vmem>>, %arg2: memref<2x1024xf32, #tpu.memory_space<vmem>>) attributes {dimension_semantics = [#tpu.dimension_semantics<parallel>], iteration_bounds = array<i64: 1>, scalar_prefetch = 0 : i64, scratch_operands = 0 : i64, tpu.core_type = #tpu.core_type<tc>, window_params = [{transform_indices = @transform_0, window_bounds = array<i64: 2, 1024>}, {transform_indices = @transform_1, window_bounds = array<i64: 2, 1024>}]} {
    %c0 = arith.constant 0 : index
    %c0_0 = arith.constant 0 : index
    %0 = vector.load %arg1[%c0, %c0_0] : memref<2x1024xf32, #tpu.memory_space<vmem>>, vector<2x1024xf32>
    %c0_1 = arith.constant 0 : index
    %c0_2 = arith.constant 0 : index
    %1 = vector.load %arg2[%c0_1, %c0_2] : memref<2x1024xf32, #tpu.memory_space<vmem>>, vector<2x1024xf32>
    tpu.vector_store %arg2[%c0_1, %c0_2], %0 {strides = array<i32>} : memref<2x1024xf32, #tpu.memory_space<vmem>>, vector<2x1024xf32>,
    return
  }
  func.func @transform_0(%arg0: i32) -> (i32, i32) {
    %c0_i32 = arith.constant 0 : i32
    %c0_i32_0 = arith.constant 0 : i32
    return %arg0, %c0_i32 : i32, i32
  }
  func.func @transform_1(%arg0: i32) -> (i32, i32) {
    %c0_i32 = arith.constant 0 : i32
    %c0_i32_0 = arith.constant 0 : i32
    return %arg0, %c0_i32 : i32, i32
  }
}

</mosaic_0001>

<llo_original>
// kernel: unimplemented_model_forward.1
$region0: #{unimplemented_model_forward.1}
  #allocation0 [shape = 'u32[]', space=smem, size = 0x4, offset = 0x4, fixed_abs, tag = 'smem constant byte address 0x4 - core index']
  #allocation1 [shape = 'u32[72,128]{1,0:T(1,128)}', space=vmem, size = 0x9000, scoped, tag = 'internal scratch']
  %s0 = inlined_call_operand.vmem [shape: f32[2,1024], index: 0, kind: input, shape index: {}, may-alias: {0,1}]
  %s1 = inlined_call_operand.vmem [shape: f32[2,1024], index: 1, kind: output, shape index: {}, may-alias: {0,1}]
  %s2 = sld [smem:[#allocation0]]
  $region14: #{unimplemented_model_forward.1} parent=0
    _
  %s4 = ssub.s32 1, %s2
  %s5 = scalar_select 0, %s4, %s2
  // Predicated region
  $region2: #{unimplemented_model_forward.1} parent=0 // pred_check
    _
  $region3: #{unimplemented_model_forward.1} parent=0 // pred_check_branch
    %7 = sbr.rel (0) target = $region5
  $region4: #{unimplemented_model_forward.1} parent=0 // pred_region
    _
  $region5: #{unimplemented_model_forward.1} parent=0 // pred_fallthru
    _
  %v8 = vld [vmem:[%s0] sm:$0xff]
  %v9 = vld [vmem:[%s0 + $0x8] sm:$0xff]
  %10 = vst [vmem:[%s1] sm:$0xff] %v8
  %11 = vst [vmem:[%s1 + $0x8] sm:$0xff] %v9
  // Predicated region
  $region6: #{unimplemented_model_forward.1} parent=0 // pred_check
    _
  $region7: #{unimplemented_model_forward.1} parent=0 // pred_check_branch
    %13 = sbr.rel (0) target = $region9
  $region8: #{unimplemented_model_forward.1} parent=0 // pred_region
    _
  $region9: #{unimplemented_model_forward.1} parent=0 // pred_fallthru
    _
  // Predicated region
  $region10: #{unimplemented_model_forward.1} parent=0 // pred_check
    _
  $region11: #{unimplemented_model_forward.1} parent=0 // pred_check_branch
    %15 = sbr.rel (0) target = $region13
  $region12: #{unimplemented_model_forward.1} parent=0 // pred_region
    _
  $region13: #{unimplemented_model_forward.1} parent=0 // pred_fallthru
    _

</llo_original>
